<compile_context>
chip_gen: v5e
topology: v5e:2x2
jax: 0.10.0
libtpu: 0.0.40
codegen_flags: <defaults>
</compile_context>

<pallas_src>
import functools

import jax
import jax.numpy as jnp
from jax.experimental import pallas as pl
from jax.experimental.pallas import tpu as pltpu


def _scale_kernel(scale_ref, x_ref, o_ref):
    # scale_ref: float32 (1,) scalar-prefetch value in SMEM (32-bit native).
    # Cast / promote in-kernel: one scalar op per grid step, free in a
    # bandwidth-bound kernel, and avoids sub-32-bit SMEM operands.
    if jnp.issubdtype(x_ref.dtype, jnp.floating):
        o_ref[...] = (x_ref[...] * scale_ref[0].astype(x_ref.dtype)).astype(o_ref.dtype)
    else:
        # Integer / bool input: promote to f32 like PyTorch int-tensor * float-scalar.
        o_ref[...] = (x_ref[...].astype(jnp.float32) * scale_ref[0]).astype(o_ref.dtype)


@functools.lru_cache(maxsize=None)
def _chip_defaults():
    """(target_block_bytes, vmem_limit_bytes, num_tensorcores) for this chip."""
    vmem_cap = None
    try:
        info = pltpu.get_tpu_info()
        vmem_cap = getattr(info, "vmem_capacity_bytes", None)
    except Exception:
        vmem_cap = None
    if vmem_cap is None:
        vmem_cap = 128 * 1024 * 1024
    if vmem_cap <= 80 * 1024 * 1024:
        # v7x-class: 64 MiB VMEM per TensorCore, 2 TensorCores per chip.
        return 4 << 20, 32 << 20, 2
    # v5e / v6e: 128 MiB VMEM, single TensorCore.
    return 8 << 20, 64 << 20, 1


def _largest_lane_multiple(total, cap):
    """Largest multiple of 128 <= cap that divides `total` (total % 128 == 0)."""
    hi = min(cap, total)
    hi -= hi % 128
    for cand in range(hi, 127, -128):
        if total % cand == 0:
            return cand
    return 128


def scale_forward(x, scale_param, *,
                  target_block_bytes=None,
                  vmem_limit_bytes=None,
                  max_lane_width=16384,
                  donate_input=False):
    """Multiply arbitrary-shape x by a learnable scalar parameter via Pallas."""
    orig_shape = x.shape
    in_dtype = x.dtype
    # PyTorch promotion: floating inputs keep their dtype, integer/bool promote.
    out_dtype = in_dtype if jnp.issubdtype(in_dtype, jnp.floating) else jnp.float32
    total = x.size

    # Scalar parameter kept in float32 for the SMEM scalar-prefetch operand.
    s = jnp.asarray(scale_param, dtype=jnp.float32).reshape(-1)[:1]

    def _xla_scale(v):
        if jnp.issubdtype(in_dtype, jnp.floating):
            return (v * s[0].astype(in_dtype)).astype(out_dtype)
        return (v.astype(jnp.float32) * s[0]).astype(out_dtype)

    if total == 0:
        return jnp.zeros(orig_shape, out_dtype)

    default_block, default_vmem, num_tc = _chip_defaults()
    if target_block_bytes is None:
        target_block_bytes = default_block
    if vmem_limit_bytes is None:
        vmem_limit_bytes = default_vmem

    x_flat = jnp.ravel(x)
    aligned = (total // 128) * 128
    if aligned == 0:
        # TODO(synk): tensors with fewer than 128 elements are handled by plain
        # XLA; a Pallas call would be pure per-step overhead at this size.
        return _xla_scale(x_flat).reshape(orig_shape)

    # ---- lane-dense 2D slab (rows, L) on the 128-aligned prefix ----
    L = _largest_lane_multiple(aligned, max_lane_width)
    rows = aligned // L
    x2d = x_flat[:aligned].reshape(rows, L)

    # ---- row block sized to ~target_block_bytes, sublane-tile aligned ----
    in_item = jnp.dtype(in_dtype).itemsize
    out_item = jnp.dtype(out_dtype).itemsize
    sub = max(8, 32 // min(in_item, out_item))        # 8 f32, 16 bf16, 32 int8/fp8
    bytes_per_row = L * max(in_item, out_item)
    max_rows = max(1, target_block_bytes // bytes_per_row)
    if max_rows >= rows:
        rb = rows                                     # one block covers everything
    else:
        rb = max(sub, (max_rows // sub) * sub)
    rb = min(rb, rows)
    n_blocks = pl.cdiv(rows, rb)

    # v7x only: ensure >= 2 blocks per TensorCore and (best effort) an even
    # block count so both cores get equal work and can double-buffer.
    # Skipped on single-TC chips (v5e/v6e) where extra grid steps are overhead.
    if num_tc > 1 and rows >= 2 * num_tc * sub:
        min_blocks = 2 * num_tc
        if n_blocks < min_blocks:
            rb = ((-(-rows // min_blocks) + sub - 1) // sub) * sub
            rb = max(sub, min(rb, rows))
            n_blocks = pl.cdiv(rows, rb)
        tries = 0
        while n_blocks > 1 and n_blocks % 2 == 1 and rb > sub and tries < 8:
            rb -= sub
            n_blocks = pl.cdiv(rows, rb)
            tries += 1

    # Optional in-place: alias x2d (operand 1; operand 0 is the SMEM scalar)
    # to the output when the caller can donate x and dtypes match.
    aliases = {1: 0} if (donate_input and out_dtype == in_dtype) else {}

    out2d = pl.pallas_call(
        _scale_kernel,
        out_shape=jax.ShapeDtypeStruct((rows, L), out_dtype),
        grid_spec=pltpu.PrefetchScalarGridSpec(
            num_scalar_prefetch=1,
            grid=(n_blocks,),
            in_specs=[pl.BlockSpec((rb, L), lambda i, s_ref: (i, 0))],
            out_specs=pl.BlockSpec((rb, L), lambda i, s_ref: (i, 0)),
        ),
        # TODO(synk): verify on v7x (xprof) that the "parallel" axis really
        # shards across both TensorCores; otherwise switch this axis to
        # pltpu.CORE_PARALLEL / pl.core_map over a tensorcore mesh.
        compiler_params=pltpu.CompilerParams(
            dimension_semantics=("parallel",),
            vmem_limit_bytes=vmem_limit_bytes,
        ),
        input_output_aliases=aliases,
    )(s, x2d)

    out_flat = out2d.reshape(-1)
    if aligned != total:
        # Ragged tail (< 128 elements): plain XLA multiply, no full-array
        # pad / slice round trips.
        tail = _xla_scale(x_flat[aligned:])
        out_flat = jnp.concatenate([out_flat, tail])
    return out_flat.reshape(orig_shape)


if __name__ == "__main__":
    key = jax.random.PRNGKey(0)

    # Learnable scalar (PyTorch: nn.Parameter(torch.tensor(scale))), perturbed
    # from the 1.0 default so the kernel is actually exercised.
    scale_param = jnp.asarray(0.5, dtype=jnp.float32)

    # Test 1: NCHW feature map (primary spec shape), single block.
    x1 = jax.random.normal(key, (2, 4, 16, 16), dtype=jnp.float32)
    y1 = scale_forward(x1, scale_param)
    jax.block_until_ready(y1)
    assert y1.shape == x1.shape and y1.dtype == x1.dtype
    assert jnp.allclose(y1, x1 * 0.5, atol=1e-6, rtol=1e-6)

    # Test 2: multi-block grid with a masked partial final block (narrow lane
    # cap + tiny block budget just to exercise the cdiv/partial-block path).
    x2 = jax.random.normal(jax.random.PRNGKey(1), (3, 5, 16, 16), dtype=jnp.float32)
    y2 = scale_forward(x2, scale_param, target_block_bytes=8 * 1024, max_lane_width=256)
    jax.block_until_ready(y2)
    assert y2.shape == x2.shape
    assert jnp.allclose(y2, x2 * 0.5, atol=1e-6, rtol=1e-6)

    # Test 3: total not divisible by 128 -> Pallas on the aligned prefix,
    # plain XLA on the <128-element tail (no full-array pad/slice).
    x3 = jax.random.normal(jax.random.PRNGKey(2), (2, 3, 5, 7), dtype=jnp.float32)
    y3 = scale_forward(x3, scale_param)
    jax.block_until_ready(y3)
    assert y3.shape == x3.shape
    assert jnp.allclose(y3, x3 * 0.5, atol=1e-6, rtol=1e-6)

    # Test 4: bf16 input with the float32 SMEM scalar (in-kernel cast path).
    x4 = jax.random.normal(jax.random.PRNGKey(3), (2, 4, 16, 16), dtype=jnp.bfloat16)
    y4 = scale_forward(x4, scale_param)
    jax.block_until_ready(y4)
    assert y4.shape == x4.shape and y4.dtype == jnp.bfloat16
    assert jnp.allclose(y4.astype(jnp.float32),
                        (x4 * jnp.bfloat16(0.5)).astype(jnp.float32),
                        atol=1e-6, rtol=1e-6)

    print("KERNEL_OK")
</pallas_src>

<mosaic_0001>
module attributes {stable_mosaic.version = 11 : i64} {
  func.func @_scale_kernel(%arg0: i32, %arg1: memref<1xf32, #tpu.memory_space<smem>>, %arg2: memref<1x2048xf32, #tpu.memory_space<vmem>>, %arg3: memref<1x2048xf32, #tpu.memory_space<vmem>>) attributes {dimension_semantics = [#tpu.dimension_semantics<parallel>], iteration_bounds = array<i64: 1>, scalar_prefetch = 1 : i64, scratch_operands = 0 : i64, tpu.core_type = #tpu.core_type<tc>, window_params = [{transform_indices = @transform_0, window_bounds = array<i64: 1, 2048>}, {transform_indices = @transform_1, window_bounds = array<i64: 1, 2048>}]} {
    %c0 = arith.constant 0 : index
    %c0_0 = arith.constant 0 : index
    %0 = vector.load %arg2[%c0, %c0_0] : memref<1x2048xf32, #tpu.memory_space<vmem>>, vector<1x2048xf32>
    %c0_1 = arith.constant 0 : index
    %1 = memref.load %arg1[%c0_1] : memref<1xf32, #tpu.memory_space<smem>>
    %2 = vector.broadcast %1 : f32 to vector<1x2048xf32>
    %3 = arith.mulf %0, %2 : vector<1x2048xf32>
    %c0_2 = arith.constant 0 : index
    %c0_3 = arith.constant 0 : index
    %4 = vector.load %arg3[%c0_2, %c0_3] : memref<1x2048xf32, #tpu.memory_space<vmem>>, vector<1x2048xf32>
    tpu.vector_store %arg3[%c0_2, %c0_3], %3 {strides = array<i32>} : memref<1x2048xf32, #tpu.memory_space<vmem>>, vector<1x2048xf32>,
    return
  }
  func.func @transform_0(%arg0: i32, %arg1: memref<1xf32, #tpu.memory_space<smem>>) -> (i32, i32) {
    %c0_i32 = arith.constant 0 : i32
    %c0_i32_0 = arith.constant 0 : i32
    return %arg0, %c0_i32 : i32, i32
  }
  func.func @transform_1(%arg0: i32, %arg1: memref<1xf32, #tpu.memory_space<smem>>) -> (i32, i32) {
    %c0_i32 = arith.constant 0 : i32
    %c0_i32_0 = arith.constant 0 : i32
    return %arg0, %c0_i32 : i32, i32
  }
}

</mosaic_0001>

<llo_original>
// kernel: tpu_custom_call.1
$region0: #{tpu_custom_call.1}
  #allocation0 [shape = 'u32[]', space=smem, size = 0x4, offset = 0x4, fixed_abs, tag = 'smem constant byte address 0x4 - core index']
  #allocation1 [shape = 'u32[72,128]{1,0:T(1,128)}', space=vmem, size = 0x9000, scoped, tag = 'internal scratch']
  #allocation2 [shape = 's32[1]{0}', space=sflag, size = 0x4, scoped, tag = 'scoped memory for tpu_custom_call.1']
  #allocation3 [shape = 'f32[1]{0:T(128)S(6)}', space=smem, size = 0x200, scoped, tag = 'prefetched SMEM operand 0']
  %s0 = inlined_call_operand.<no memory space> [shape: f32[1], index: 0, kind: input, shape index: {}]
  %s1 = inlined_call_operand.hbm [shape: f32[1,2048], index: 1, kind: input, shape index: {}]
  %s2 = inlined_call_operand.hbm [shape: f32[1,2048], index: 2, kind: output, shape index: {}]
  %s3 = sld [smem:[#allocation0]]
  $region18: #{tpu_custom_call.1} parent=0
    _
  %s5 = ssub.s32 1, %s3
  %s6 = scalar_select 0, %s5, %s3
  %7 = sst [smem:[#allocation3]] %s0
  $region1: #{tpu_custom_call.1} parent=0
    #allocation4 [shape = 'u8[8192]{0}', space=vmem, size = 0x2000, scoped, tag = 'input window, operand 1, single buffered']
    #allocation5 [shape = 's32[1]{0}', space=sflag, size = 0x4, scoped, tag = 'scoped memory for tpu_custom_call.1']
    #allocation6 [shape = 's32[1]{0}', space=sflag, size = 0x4, scoped, tag = 'scoped memory for tpu_custom_call.1']
    #allocation7 [shape = 'u8[8192]{0}', space=vmem, size = 0x2000, scoped, tag = 'output window, operand 0, single buffered']
    %8 = vsyncpa [#allocation5], 0
    %9 = vsyncpa [#allocation6], 0
    // Predicated region
    $region2: #{tpu_custom_call.1} parent=1 // pred_check
      _
    $region3: #{tpu_custom_call.1} parent=1 // pred_check_branch
      %11 = sbr.rel (0) target = $region5
    $region4: #{tpu_custom_call.1} parent=1 // pred_region
      %13 = vsyncadd [#allocation5], 0
      %s15 = sshll.u32 %s1, 4
      %s16 = int_to_ptr.hbm [resolvable:$true] %s15
      %s17 = sshll.u32 [#allocation4], 4
      %s18 = int_to_ptr.vmem [resolvable:$true] %s17
      %20 = dma.hbm_to_vmem [thread:$0]  %s16, 256, %s18, [#allocation5]
    $region5: #{tpu_custom_call.1} parent=1 // pred_fallthru
      _
    // Predicated region
    $region6: #{tpu_custom_call.1} parent=1 // pred_check
      _
    $region7: #{tpu_custom_call.1} parent=1 // pred_check_branch
      %22 = sbr.rel (0) target = $region9
    $region8: #{tpu_custom_call.1} parent=1 // pred_region
      %24 = dma.done [#allocation5], 256
    $region9: #{tpu_custom_call.1} parent=1 // pred_fallthru
      _
    %v25 = vld [vmem:[#allocation4] sm:$0xff]
    %v26 = vld [vmem:[#allocation4 + $0x8] sm:$0xff]
    %s27 = sld [smem:[#allocation3]]
    %v28 = vstv %s27
    %v29 = vmul.f32 %v25, %v28
    %v30 = vmul.f32 %v26, %v28
    %31 = vst [vmem:[#allocation7] sm:$0xff] %v29
    %32 = vst [vmem:[#allocation7 + $0x8] sm:$0xff] %v30
    // Predicated region
    $region10: #{tpu_custom_call.1} parent=1 // pred_check
      _
    $region11: #{tpu_custom_call.1} parent=1 // pred_check_branch
      %34 = sbr.rel (0) target = $region13
    $region12: #{tpu_custom_call.1} parent=1 // pred_region
      %36 = vsyncadd [#allocation6], 0
      %s38 = sshll.u32 [#allocation7], 4
      %s39 = int_to_ptr.vmem [resolvable:$true] %s38
      %s40 = sshll.u32 %s2, 4
      %s41 = int_to_ptr.hbm [resolvable:$true] %s40
      %43 = dma.vmem_to_hbm [thread:$0]  %s39, 256, %s41, [#allocation6]
    $region13: #{tpu_custom_call.1} parent=1 // pred_fallthru
      _
    // Predicated region
    $region14: #{tpu_custom_call.1} parent=1 // pred_check
      _
    $region15: #{tpu_custom_call.1} parent=1 // pred_check_branch
      %45 = sbr.rel (0) target = $region17
    $region16: #{tpu_custom_call.1} parent=1 // pred_region
      %47 = dma.done [#allocation6], 256
    $region17: #{tpu_custom_call.1} parent=1 // pred_fallthru
      _
    %48 = vsyncpa [#allocation5], 1
    %49 = vsyncpa [#allocation6], 1

</llo_original>
